<compile_context>
chip_gen: v6e
topology: v6e:2x2x1
jax: 0.10.0
libtpu: 0.0.40
codegen_flags: <defaults>
</compile_context>

<pallas_src>
import jax
import jax.numpy as jnp
from jax import lax
from jax.experimental import pallas as pl
from jax.experimental.pallas import tpu as pltpu


_VMEM_LIMIT_BYTES = 32 * 1024 * 1024  # safe on v5e/v6e/v7x; our tiles are tiny


def _round_up(x, m):
    return ((x + m - 1) // m) * m


def _stats_kernel(x_ref, sum_ref, sq_ref):
    """Pass 1: per-row sum / sum-of-squares, accumulated over HW tiles.

    x_ref  : (row_tile, hw_tile)  VMEM
    sum_ref: (row_tile, 1)        VMEM f32 (resident across the hw grid axis)
    sq_ref : (row_tile, 1)        VMEM f32
    """
    h = pl.program_id(1)

    @pl.when(h == 0)
    def _():
        sum_ref[...] = jnp.zeros_like(sum_ref)
        sq_ref[...] = jnp.zeros_like(sq_ref)

    x = x_ref[...].astype(jnp.float32)
    sum_ref[...] += jnp.sum(x, axis=-1, keepdims=True)
    sq_ref[...] += jnp.sum(x * x, axis=-1, keepdims=True)


def _normalize_kernel(x_ref, scale_ref, shift_ref, o_ref):
    """Pass 2: y = x * scale + shift with precomputed per-row scale/shift."""
    y = x_ref[...].astype(jnp.float32) * scale_ref[...] + shift_ref[...]
    o_ref[...] = y.astype(o_ref.dtype)


def switch_norm_2d(x, weight, bias, mean_weight, var_weight, eps=1e-5):
    """SwitchNorm2d forward (training-mode statistics, using_bn=True).

    x           : (N, C, H, W)
    weight/bias : (1, C, 1, 1)
    mean_weight : (3,)  raw (pre-softmax) mixing logits
    var_weight  : (3,)  raw (pre-softmax) mixing logits
    """
    N, C, H, W = x.shape
    hw = H * W
    R = N * C

    # Lane-dense HW tiles (multiples of 128), sublane-dense row tiles.
    hw_tile = min(_round_up(hw, 128), 512)
    hw_pad = _round_up(hw, hw_tile)
    row_tile = min(_round_up(R, 8), 256)
    r_pad = _round_up(R, row_tile)

    x2 = x.reshape(R, hw)
    if (r_pad, hw_pad) != (R, hw):
        # Zero padding is statistics-neutral: zeros add nothing to sum or
        # sum-of-squares, and means below divide by the true hw.
        x2 = jnp.pad(x2, ((0, r_pad - R), (0, hw_pad - hw)))

    r_tiles = r_pad // row_tile
    hw_tiles = hw_pad // hw_tile

    # ---------------- pass 1: per-row sum / sumsq -------------------------
    row_sum, row_sq = pl.pallas_call(
        _stats_kernel,
        grid=(r_tiles, hw_tiles),
        in_specs=[pl.BlockSpec((row_tile, hw_tile), lambda r, h: (r, h))],
        out_specs=[
            pl.BlockSpec((row_tile, 1), lambda r, h: (r, 0)),
            pl.BlockSpec((row_tile, 1), lambda r, h: (r, 0)),
        ],
        out_shape=[
            jax.ShapeDtypeStruct((r_pad, 1), jnp.float32),
            jax.ShapeDtypeStruct((r_pad, 1), jnp.float32),
        ],
        compiler_params=pltpu.CompilerParams(
            dimension_semantics=("parallel", "arbitrary"),
            vmem_limit_bytes=_VMEM_LIMIT_BYTES,
        ),
    )(x2)

    # ---------------- tiny stats glue (plain JAX, O(N*C)) -----------------
    inv_hw = 1.0 / float(hw)
    mean_in = (row_sum[:R, 0] * inv_hw).reshape(N, C)
    ex2 = (row_sq[:R, 0] * inv_hw).reshape(N, C)
    bessel = float(hw) / float(max(hw - 1, 1))          # torch.var is unbiased (ddof=1)
    var_in = (ex2 - mean_in * mean_in) * bessel

    temp = var_in + mean_in * mean_in
    mean_ln = jnp.mean(mean_in, axis=1, keepdims=True)          # (N, 1)
    var_ln = jnp.mean(temp, axis=1, keepdims=True) - mean_ln * mean_ln
    mean_bn = jnp.mean(mean_in, axis=0, keepdims=True)          # (1, C)
    var_bn = jnp.mean(temp, axis=0, keepdims=True) - mean_bn * mean_bn

    mw = jax.nn.softmax(mean_weight.astype(jnp.float32), axis=0)
    vw = jax.nn.softmax(var_weight.astype(jnp.float32), axis=0)

    mean = mw[0] * mean_in + mw[1] * mean_ln + mw[2] * mean_bn  # (N, C)
    var = vw[0] * var_in + vw[1] * var_ln + vw[2] * var_bn      # (N, C)

    g = weight.reshape(1, C).astype(jnp.float32)
    b = bias.reshape(1, C).astype(jnp.float32)
    # Clamp guards the one-pass variance against tiny negative values.
    inv_std = lax.rsqrt(jnp.maximum(var, 0.0) + float(eps))
    sc = g * inv_std                                            # (N, C)
    scale = sc.reshape(R, 1)
    shift = (b - mean * sc).reshape(R, 1)
    if r_pad != R:
        scale = jnp.pad(scale, ((0, r_pad - R), (0, 0)))
        shift = jnp.pad(shift, ((0, r_pad - R), (0, 0)))

    # ---------------- pass 2: elementwise normalize ------------------------
    out = pl.pallas_call(
        _normalize_kernel,
        grid=(r_tiles, hw_tiles),
        in_specs=[
            pl.BlockSpec((row_tile, hw_tile), lambda r, h: (r, h)),
            pl.BlockSpec((row_tile, 1), lambda r, h: (r, 0)),
            pl.BlockSpec((row_tile, 1), lambda r, h: (r, 0)),
        ],
        out_specs=pl.BlockSpec((row_tile, hw_tile), lambda r, h: (r, h)),
        out_shape=jax.ShapeDtypeStruct((r_pad, hw_pad), x.dtype),
        compiler_params=pltpu.CompilerParams(
            dimension_semantics=("parallel", "parallel"),
            vmem_limit_bytes=_VMEM_LIMIT_BYTES,
        ),
    )(x2, scale, shift)

    return out[:R, :hw].reshape(N, C, H, W)


def _reference_switch_norm(x, weight, bias, mean_weight, var_weight, eps=1e-5):
    """Pure-JAX reference mirroring the PyTorch forward (training branch)."""
    N, C, H, W = x.shape
    xr = x.reshape(N, C, -1).astype(jnp.float32)
    mean_in = xr.mean(-1, keepdims=True)
    var_in = xr.var(-1, keepdims=True, ddof=1)
    mean_ln = mean_in.mean(1, keepdims=True)
    temp = var_in + mean_in ** 2
    var_ln = temp.mean(1, keepdims=True) - mean_ln ** 2
    mean_bn = mean_in.mean(0, keepdims=True)
    var_bn = temp.mean(0, keepdims=True) - mean_bn ** 2
    mw = jax.nn.softmax(mean_weight, axis=0)
    vw = jax.nn.softmax(var_weight, axis=0)
    mean = mw[0] * mean_in + mw[1] * mean_ln + mw[2] * mean_bn
    var = vw[0] * var_in + vw[1] * var_ln + vw[2] * var_bn
    xn = (xr - mean) / jnp.sqrt(var + eps)
    xn = xn.reshape(N, C, H, W)
    return xn * weight + bias


if __name__ == "__main__":
    key = jax.random.PRNGKey(0)
    N, C, H, W = 2, 4, 16, 16

    k_x, k_mw, k_vw = jax.random.split(key, 3)
    x = jax.random.normal(k_x, (N, C, H, W), dtype=jnp.float32)

    # Deterministic parameter init per the module's __init__ (plus a small
    # perturbation on the mixing logits so the softmax is non-trivial).
    weight = jnp.ones((1, C, 1, 1), dtype=jnp.float32)          # self.weight
    bias = jnp.zeros((1, C, 1, 1), dtype=jnp.float32)           # self.bias
    mean_weight = jnp.ones((3,), jnp.float32) + 0.1 * jax.random.normal(k_mw, (3,))
    var_weight = jnp.ones((3,), jnp.float32) + 0.1 * jax.random.normal(k_vw, (3,))

    y = switch_norm_2d(x, weight, bias, mean_weight, var_weight, eps=1e-5)
    y = jax.block_until_ready(y)

    y_ref = _reference_switch_norm(x, weight, bias, mean_weight, var_weight, eps=1e-5)
    assert y.shape == (N, C, H, W)
    assert jnp.max(jnp.abs(y - y_ref)) < 1e-4, "mismatch vs. reference"

    print("KERNEL_OK")
</pallas_src>

<mosaic_0001>
module attributes {stable_mosaic.version = 11 : i64} {
  func.func @_stats_kernel(%arg0: i32, %arg1: i32, %arg2: memref<8x256xf32, #tpu.memory_space<vmem>>, %arg3: memref<8x1xf32, #tpu.memory_space<vmem>>, %arg4: memref<8x1xf32, #tpu.memory_space<vmem>>) attributes {dimension_semantics = [#tpu.dimension_semantics<parallel>, #tpu.dimension_semantics<arbitrary>], iteration_bounds = array<i64: 1, 1>, scalar_prefetch = 0 : i64, scratch_operands = 0 : i64, tpu.core_type = #tpu.core_type<tc>, window_params = [{transform_indices = @transform_0, window_bounds = array<i64: 8, 256>}, {transform_indices = @transform_1, window_bounds = array<i64: 8, 1>}, {transform_indices = @transform_2, window_bounds = array<i64: 8, 1>}]} {
    %c0_i32 = arith.constant 0 : i32
    %0 = arith.cmpi eq, %arg1, %c0_i32 : i32
    %1 = arith.extui %0 : i1 to i32
    %c0_i32_0 = arith.constant 0 : i32
    %2 = arith.cmpi ne, %1, %c0_i32_0 : i32
    scf.if %2 {
      %cst_11 = arith.constant 0.000000e+00 : f32
      %15 = vector.broadcast %cst_11 : f32 to vector<8x1xf32>
      %c0_12 = arith.constant 0 : index
      %c0_13 = arith.constant 0 : index
      %16 = vector.load %arg3[%c0_12, %c0_13] : memref<8x1xf32, #tpu.memory_space<vmem>>, vector<8x1xf32>
      tpu.vector_store %arg3[%c0_12, %c0_13], %15 {strides = array<i32>} : memref<8x1xf32, #tpu.memory_space<vmem>>, vector<8x1xf32>,
      %cst_14 = arith.constant 0.000000e+00 : f32
      %17 = vector.broadcast %cst_14 : f32 to vector<8x1xf32>
      %c0_15 = arith.constant 0 : index
      %c0_16 = arith.constant 0 : index
      %18 = vector.load %arg4[%c0_15, %c0_16] : memref<8x1xf32, #tpu.memory_space<vmem>>, vector<8x1xf32>
      tpu.vector_store %arg4[%c0_15, %c0_16], %17 {strides = array<i32>} : memref<8x1xf32, #tpu.memory_space<vmem>>, vector<8x1xf32>,
    } else {
    }
    %c0 = arith.constant 0 : index
    %c0_1 = arith.constant 0 : index
    %3 = vector.load %arg2[%c0, %c0_1] : memref<8x256xf32, #tpu.memory_space<vmem>>, vector<8x256xf32>
    %c0_2 = arith.constant 0 : index
    %c0_3 = arith.constant 0 : index
    %4 = vector.load %arg3[%c0_2, %c0_3] : memref<8x1xf32, #tpu.memory_space<vmem>>, vector<8x1xf32>
    %cst = arith.constant dense<0.000000e+00> : vector<8xf32>
    %5 = vector.multi_reduction <add>, %3, %cst [1] : vector<8x256xf32> to vector<8xf32>
    %6 = vector.shape_cast %5 : vector<8xf32> to vector<8x1xf32>
    %7 = arith.addf %4, %6 : vector<8x1xf32>
    %c0_4 = arith.constant 0 : index
    %c0_5 = arith.constant 0 : index
    %8 = vector.load %arg3[%c0_4, %c0_5] : memref<8x1xf32, #tpu.memory_space<vmem>>, vector<8x1xf32>
    tpu.vector_store %arg3[%c0_4, %c0_5], %7 {strides = array<i32>} : memref<8x1xf32, #tpu.memory_space<vmem>>, vector<8x1xf32>,
    %c0_6 = arith.constant 0 : index
    %c0_7 = arith.constant 0 : index
    %9 = vector.load %arg4[%c0_6, %c0_7] : memref<8x1xf32, #tpu.memory_space<vmem>>, vector<8x1xf32>
    %10 = arith.mulf %3, %3 : vector<8x256xf32>
    %cst_8 = arith.constant dense<0.000000e+00> : vector<8xf32>
    %11 = vector.multi_reduction <add>, %10, %cst_8 [1] : vector<8x256xf32> to vector<8xf32>
    %12 = vector.shape_cast %11 : vector<8xf32> to vector<8x1xf32>
    %13 = arith.addf %9, %12 : vector<8x1xf32>
    %c0_9 = arith.constant 0 : index
    %c0_10 = arith.constant 0 : index
    %14 = vector.load %arg4[%c0_9, %c0_10] : memref<8x1xf32, #tpu.memory_space<vmem>>, vector<8x1xf32>
    tpu.vector_store %arg4[%c0_9, %c0_10], %13 {strides = array<i32>} : memref<8x1xf32, #tpu.memory_space<vmem>>, vector<8x1xf32>,
    return
  }
  func.func @transform_0(%arg0: i32, %arg1: i32) -> (i32, i32) {
    %c0_i32 = arith.constant 0 : i32
    return %arg0, %arg1 : i32, i32
  }
  func.func @transform_1(%arg0: i32, %arg1: i32) -> (i32, i32) {
    %c0_i32 = arith.constant 0 : i32
    %c0_i32_0 = arith.constant 0 : i32
    return %arg0, %c0_i32 : i32, i32
  }
  func.func @transform_2(%arg0: i32, %arg1: i32) -> (i32, i32) {
    %c0_i32 = arith.constant 0 : i32
    %c0_i32_0 = arith.constant 0 : i32
    return %arg0, %c0_i32 : i32, i32
  }
}

</mosaic_0001>

<llo_original>
// kernel: tpu_custom_call.1
$region0: #{tpu_custom_call.1}
  #allocation0 [shape = 'u32[]', space=smem, size = 0x4, offset = 0x4, fixed_abs, tag = 'smem constant byte address 0x4 - core index']
  #allocation1 [shape = 'u32[144,128]{1,0:T(1,128)}', space=vmem, size = 0x12000, scoped, tag = 'internal scratch']
  %s0 = inlined_call_operand.hbm [shape: f32[8,256], index: 0, kind: input, shape index: {}]
  %s1 = inlined_call_operand.vmem [shape: f32[8,1], index: 1, kind: output, shape index: {0}]
  %s2 = inlined_call_operand.vmem [shape: f32[8,1], index: 2, kind: output, shape index: {1}]
  %3 = xla_tuple %s1, %s2
  %s4 = sld [smem:[#allocation0]]
  $region30: #{tpu_custom_call.1} parent=0
    _
  %s6 = ssub.s32 1, %s4
  %s7 = scalar_select 0, %s6, %s4
  $region1: #{tpu_custom_call.1} parent=0
    #allocation2 [shape = 'u8[8192]{0}', space=vmem, size = 0x2000, scoped, tag = 'input window, operand 0, single buffered']
    #allocation3 [shape = 's32[1]{0}', space=sflag, size = 0x4, scoped, tag = 'scoped memory for tpu_custom_call.1']
    %8 = vsyncpa [#allocation3], 0
    // Predicated region
    $region2: #{tpu_custom_call.1} parent=1 // pred_check
      _
    $region3: #{tpu_custom_call.1} parent=1 // pred_check_branch
      %10 = sbr.rel (0) target = $region5
    $region4: #{tpu_custom_call.1} parent=1 // pred_region
      %s12 = ssub.s32 256, 256
      %13 = vsyncadd [#allocation3], %s12
      %s15 = sshll.u32 [#allocation2], 4
      %s16 = int_to_ptr.vmem [resolvable:$true] %s15
      %18 = dma.hbm_to_vmem [thread:$0]  %s0, 256, %s16, [#allocation3]
    $region5: #{tpu_custom_call.1} parent=1 // pred_fallthru
      _
    // Predicated region
    $region6: #{tpu_custom_call.1} parent=1 // pred_check
      _
    $region7: #{tpu_custom_call.1} parent=1 // pred_check_branch
      %20 = sbr.rel (0) target = $region9
    $region8: #{tpu_custom_call.1} parent=1 // pred_region
      %21 = dma.done [#allocation3], 256
    $region9: #{tpu_custom_call.1} parent=1 // pred_fallthru
      _
    %p22 = scmp.eq.s32.totalorder 0, 0
    // Predicated region
    $region10: #{tpu_custom_call.1} parent=1 // pred_check
      %p23 = pneg %p22
    $region11: #{tpu_custom_call.1} parent=1 // pred_check_branch
      %25 = sbr.rel (%p23) target = $region13
    $region12: #{tpu_custom_call.1} parent=1 // pred_region
      %vm26 = vcmask 7168
      %27 = vst.msk [vmem:[%s1] sm:$0xff] %vm26, 0.0
      %28 = vst.msk [vmem:[%s2] sm:$0xff] %vm26, 0.0
    $region13: #{tpu_custom_call.1} parent=1 // pred_fallthru
      _
    %v29 = vld [vmem:[#allocation2] sm:$0xff]
    %v30 = vld [vmem:[#allocation2 + $0x8] sm:$0xff]
    %v31 = vld [vmem:[%s1] sm:$0xff]
    %v32 = vadd.f32 %v29, %v30
    %33 = vadd.xlane.f32.xlu0 %v32
    %v34 = vpop.xlane.xlu0 %33
    %v35 = vadd.f32 %v31, %v34
    %vm36 = vcmask 7168
    %37 = vst.msk [vmem:[%s1] sm:$0xff] %vm36, %v35
    %v38 = vld [vmem:[%s2] sm:$0xff]
    %v39 = vmul.f32 %v29, %v29
    %v40 = vmul.f32 %v30, %v30
    %v41 = vadd.f32 %v39, %v40
    %42 = vadd.xlane.f32.xlu0 %v41
    %v43 = vpop.xlane.xlu0 %42
    %v44 = vadd.f32 %v38, %v43
    %45 = vst.msk [vmem:[%s2] sm:$0xff] %vm36, %v44
    // Predicated region
    $region14: #{tpu_custom_call.1} parent=1 // pred_check
      _
    $region15: #{tpu_custom_call.1} parent=1 // pred_check_branch
      %47 = sbr.rel (0) target = $region17
    $region16: #{tpu_custom_call.1} parent=1 // pred_region
      _
    $region17: #{tpu_custom_call.1} parent=1 // pred_fallthru
      _
    // Predicated region
    $region18: #{tpu_custom_call.1} parent=1 // pred_check
      _
    $region19: #{tpu_custom_call.1} parent=1 // pred_check_branch
      %49 = sbr.rel (0) target = $region21
    $region20: #{tpu_custom_call.1} parent=1 // pred_region
      _
    $region21: #{tpu_custom_call.1} parent=1 // pred_fallthru
      _
    // Predicated region
    $region22: #{tpu_custom_call.1} parent=1 // pred_check
      _
    $region23: #{tpu_custom_call.1} parent=1 // pred_check_branch
      %51 = sbr.rel (0) target = $region25
    $region24: #{tpu_custom_call.1} parent=1 // pred_region
      _
    $region25: #{tpu_custom_call.1} parent=1 // pred_fallthru
      _
    // Predicated region
    $region26: #{tpu_custom_call.1} parent=1 // pred_check
      _
    $region27: #{tpu_custom_call.1} parent=1 // pred_check_branch
      %53 = sbr.rel (0) target = $region29
    $region28: #{tpu_custom_call.1} parent=1 // pred_region
      _
    $region29: #{tpu_custom_call.1} parent=1 // pred_fallthru
      _
    %54 = vsyncpa [#allocation3], 1

</llo_original>
